<compile_context>
chip_gen: v5e
topology: v5e:2x2
jax: 0.10.0
libtpu: 0.0.40
codegen_flags: <defaults>
</compile_context>

<pallas_src>
import functools

import jax
import jax.numpy as jnp
from jax.experimental import pallas as pl
from jax.experimental.pallas import tpu as pltpu

EPS = 1e-5
LANE = 128
CHUNK = 1024  # pass-1 inner chunk width (lanes)


def _round_up(x, m):
    return ((x + m - 1) // m) * m


def _plan(length, c_in, c_out, tl_target):
    """Pick the lane tile `tl`, padded length, #tiles and the pass-1 chunk width."""
    l128 = _round_up(length, LANE)
    # Cap the tile so double-buffered (x, out) blocks stay well under v7x's 64 MiB VMEM.
    vmem_cap = max(LANE, ((40 << 20) // (2 * (c_in + c_out) * 4)) // LANE * LANE)
    tl_cap = max(LANE, (tl_target // LANE) * LANE)
    tl_cap = min(tl_cap, vmem_cap)
    num_tiles = pl.cdiv(l128, tl_cap)
    tl = _round_up(pl.cdiv(l128, num_tiles), LANE)
    padded = num_tiles * tl
    chunk = min(CHUNK, tl)
    return tl, padded, num_tiles, chunk


def _stats_kernel(x_ref, w_ref, sum_ref, ssq_ref, *, chunk, n_full, rem):
    # x_ref: (C_in, TL)   w_ref: (C_out, C_in)
    # sum_ref / ssq_ref: (C_out, 1) per-batch partials; output block index depends only on
    # the batch axis, so it stays VMEM-resident across the (arbitrary) L-tile axis and each
    # megacore shard touches disjoint blocks.
    @pl.when(pl.program_id(1) == 0)
    def _():
        sum_ref[...] = jnp.zeros_like(sum_ref)
        ssq_ref[...] = jnp.zeros_like(ssq_ref)

    w = w_ref[...]
    c_out = w.shape[0]

    def body(c, carry):
        s, q = carry
        off = pl.multiple_of(c * chunk, LANE)
        y = jnp.dot(w, x_ref[:, pl.ds(off, chunk)], preferred_element_type=jnp.float32)
        return (s + y, q + y * y)

    init = (jnp.zeros((c_out, chunk), jnp.float32),
            jnp.zeros((c_out, chunk), jnp.float32))
    s, q = jax.lax.fori_loop(0, n_full, body, init, unroll=True)

    s_tot = jnp.sum(s, axis=1, keepdims=True)
    q_tot = jnp.sum(q, axis=1, keepdims=True)
    if rem:  # static tail chunk (rem is a static multiple of 128)
        yt = jnp.dot(w, x_ref[:, n_full * chunk:], preferred_element_type=jnp.float32)
        s_tot = s_tot + jnp.sum(yt, axis=1, keepdims=True)
        q_tot = q_tot + jnp.sum(yt * yt, axis=1, keepdims=True)

    sum_ref[...] += s_tot
    ssq_ref[...] += q_tot


def _apply_kernel(x_ref, w_ref, scale_ref, shift_ref, o_ref):
    # Fold the per-channel BN scale into W's rows (tiny (C_out, C_in) work in-kernel; do NOT
    # hoist to the wrapper), so the big-tensor epilogue is exactly one broadcast add.
    w_s = w_ref[...] * scale_ref[...]
    y = jnp.dot(w_s, x_ref[...], preferred_element_type=jnp.float32)
    o_ref[...] = (y + shift_ref[...]).astype(o_ref.dtype)


def shortcut_block(x, w, b, gamma, beta, *, tl_target=65536, out_dtype=None):
    """x: (N, C_in, L); w: (C_out, C_in); b/gamma/beta: (C_out,). Returns (N, C_out, L)."""
    del b  # Conv bias cancels exactly under BatchNorm's batch-mean subtraction.
    n, c_in, length = x.shape
    c_out = w.shape[0]
    out_dtype = out_dtype or x.dtype  # bf16 output is a valid opt-in to cut write traffic

    tl, padded, num_tiles, chunk = _plan(length, c_in, c_out, tl_target)
    n_full, rem = divmod(tl, chunk)

    x = x.astype(jnp.float32)
    w = w.astype(jnp.float32)
    if padded != length:
        # Zero-pad L so the padded tail contributes exactly 0 to the batch statistics and
        # x-tile reads stay in bounds; the output is NOT padded (Pallas masks the boundary
        # tile's store), so no extra full-output copy is incurred.
        x = jnp.pad(x, ((0, 0), (0, 0), (0, padded - length)))

    grid = (n, num_tiles)
    x_spec = pl.BlockSpec((None, c_in, tl), lambda i, j: (i, 0, j))
    w_spec = pl.BlockSpec((c_out, c_in), lambda i, j: (0, 0))
    vec_spec = pl.BlockSpec((c_out, 1), lambda i, j: (0, 0))
    part_spec = pl.BlockSpec((None, c_out, 1), lambda i, j: (i, 0, 0))
    vmem_limit = int(min(64 << 20, max(32 << 20, 2 * (c_in + c_out) * tl * 4 + (4 << 20))))

    # Pass 1: per-batch partial (sum, sum-of-squares) of y = W @ x.
    part_sum, part_ssq = pl.pallas_call(
        functools.partial(_stats_kernel, chunk=chunk, n_full=n_full, rem=rem),
        out_shape=(jax.ShapeDtypeStruct((n, c_out, 1), jnp.float32),
                   jax.ShapeDtypeStruct((n, c_out, 1), jnp.float32)),
        grid_spec=pltpu.PrefetchScalarGridSpec(
            num_scalar_prefetch=0,
            grid=grid,
            in_specs=[x_spec, w_spec],
            out_specs=[part_spec, part_spec],
        ),
        compiler_params=pltpu.CompilerParams(
            dimension_semantics=("parallel", "arbitrary"),
            vmem_limit_bytes=vmem_limit),
    )(x, w)

    # Tiny (n x C_out) combine in plain JAX: fold BN batch stats into scale / shift.
    # Note: E[y^2] - mean^2 in f32 can cancel badly for |mean| >> std inputs; acceptable at
    # the module's data scales, revisit with a shifted accumulation if that regime matters.
    count = jnp.float32(n * length)
    mean = jnp.sum(part_sum, axis=0) / count                           # (C_out, 1)
    var = jnp.maximum(jnp.sum(part_ssq, axis=0) / count - mean * mean, 0.0)  # biased var
    scale = gamma.reshape(c_out, 1).astype(jnp.float32) * jax.lax.rsqrt(var + EPS)
    shift = beta.reshape(c_out, 1).astype(jnp.float32) - mean * scale

    # Pass 2: recompute the cheap matmul per tile and apply y * scale + shift.
    out = pl.pallas_call(
        _apply_kernel,
        out_shape=jax.ShapeDtypeStruct((n, c_out, length), out_dtype),
        grid_spec=pltpu.PrefetchScalarGridSpec(
            num_scalar_prefetch=0,
            grid=grid,
            in_specs=[x_spec, w_spec, vec_spec, vec_spec],
            out_specs=pl.BlockSpec((None, c_out, tl), lambda i, j: (i, 0, j)),
        ),
        compiler_params=pltpu.CompilerParams(
            dimension_semantics=("parallel", "parallel"),
            vmem_limit_bytes=vmem_limit),
    )(x, w, scale, shift)
    return out


def _reference(x, w, b, gamma, beta):
    # Pure-JAX reference mirroring PyTorch Conv1d(k=1) + BatchNorm1d (training mode).
    y = jnp.einsum("oc,ncl->nol", w, x) + b[None, :, None]
    mean = jnp.mean(y, axis=(0, 2), keepdims=True)
    var = jnp.mean((y - mean) ** 2, axis=(0, 2), keepdims=True)
    yhat = (y - mean) / jnp.sqrt(var + EPS)
    return gamma[None, :, None] * yhat + beta[None, :, None]


def _run_case(key, n, c_in, c_out, length, tl_target):
    k_x, k_w, k_b, k_g, k_be = jax.random.split(key, 5)
    x = jax.random.normal(k_x, (n, c_in, length), dtype=jnp.float32)
    bound = 1.0 / jnp.sqrt(jnp.float32(c_in))
    w = jax.random.uniform(k_w, (c_out, c_in), minval=-bound, maxval=bound, dtype=jnp.float32)
    b = jax.random.uniform(k_b, (c_out,), minval=-bound, maxval=bound, dtype=jnp.float32)
    gamma = 1.0 + 0.1 * jax.random.normal(k_g, (c_out,), dtype=jnp.float32)
    beta = 0.1 * jax.random.normal(k_be, (c_out,), dtype=jnp.float32)

    out = jax.block_until_ready(shortcut_block(x, w, b, gamma, beta, tl_target=tl_target))
    ref = _reference(x, w, b, gamma, beta)
    assert out.shape == (n, c_out, length), f"bad shape {out.shape}"
    assert jnp.allclose(out, ref, atol=1e-4, rtol=1e-4), "mismatch vs reference"


if __name__ == "__main__":
    key = jax.random.PRNGKey(0)
    k1, k2, k3 = jax.random.split(key, 3)

    # Small shape matching the module defaults (single tile, L padded 16 -> 128, clipped store).
    _run_case(k1, n=2, c_in=4, c_out=8, length=16, tl_target=65536)
    # L a clean multiple of 128: no padding, single large tile.
    _run_case(k2, n=2, c_in=4, c_out=8, length=256, tl_target=65536)
    # Awkward L with a tiny tile target: multi-tile accumulation + padding + boundary clipping.
    _run_case(k3, n=2, c_in=4, c_out=8, length=300, tl_target=128)

    print("KERNEL_OK")
</pallas_src>

<mosaic_0001>
module attributes {stable_mosaic.version = 11 : i64} {
  func.func @_stats_kernel(%arg0: i32, %arg1: i32, %arg2: memref<1x4x128xf32, #tpu.memory_space<vmem>>, %arg3: memref<8x4xf32, #tpu.memory_space<vmem>>, %arg4: memref<1x8x1xf32, #tpu.memory_space<vmem>>, %arg5: memref<1x8x1xf32, #tpu.memory_space<vmem>>) attributes {dimension_semantics = [#tpu.dimension_semantics<parallel>, #tpu.dimension_semantics<arbitrary>], iteration_bounds = array<i64: 2, 1>, scalar_prefetch = 0 : i64, scratch_operands = 0 : i64, tpu.core_type = #tpu.core_type<tc>, window_params = [{transform_indices = @transform_0, window_bounds = array<i64: 1, 4, 128>}, {pipeline_mode = #tpu.pipeline_mode<synchronous>, transform_indices = @transform_1, window_bounds = array<i64: 8, 4>}, {transform_indices = @transform_2, window_bounds = array<i64: 1, 8, 1>}, {transform_indices = @transform_3, window_bounds = array<i64: 1, 8, 1>}]} {
    %c0_i32 = arith.constant 0 : i32
    %0 = arith.cmpi eq, %arg1, %c0_i32 : i32
    %1 = arith.extui %0 : i1 to i32
    %c0_i32_0 = arith.constant 0 : i32
    %2 = arith.cmpi ne, %1, %c0_i32_0 : i32
    scf.if %2 {
      %cst_21 = arith.constant 0.000000e+00 : f32
      %31 = vector.broadcast %cst_21 : f32 to vector<8x1xf32>
      %c0_22 = arith.constant 0 : index
      %c0_23 = arith.constant 0 : index
      %c0_24 = arith.constant 0 : index
      %32 = vector.load %arg4[%c0_22, %c0_23, %c0_24] : memref<1x8x1xf32, #tpu.memory_space<vmem>>, vector<1x8x1xf32>
      %33 = vector.shape_cast %32 : vector<1x8x1xf32> to vector<8x1xf32>
      %34 = vector.shape_cast %31 : vector<8x1xf32> to vector<1x8x1xf32>
      tpu.vector_store %arg4[%c0_22, %c0_23, %c0_24], %34 {strides = array<i32>} : memref<1x8x1xf32, #tpu.memory_space<vmem>>, vector<1x8x1xf32>,
      %cst_25 = arith.constant 0.000000e+00 : f32
      %35 = vector.broadcast %cst_25 : f32 to vector<8x1xf32>
      %c0_26 = arith.constant 0 : index
      %c0_27 = arith.constant 0 : index
      %c0_28 = arith.constant 0 : index
      %36 = vector.load %arg5[%c0_26, %c0_27, %c0_28] : memref<1x8x1xf32, #tpu.memory_space<vmem>>, vector<1x8x1xf32>
      %37 = vector.shape_cast %36 : vector<1x8x1xf32> to vector<8x1xf32>
      %38 = vector.shape_cast %35 : vector<8x1xf32> to vector<1x8x1xf32>
      tpu.vector_store %arg5[%c0_26, %c0_27, %c0_28], %38 {strides = array<i32>} : memref<1x8x1xf32, #tpu.memory_space<vmem>>, vector<1x8x1xf32>,
    } else {
    }
    %c0 = arith.constant 0 : index
    %c0_1 = arith.constant 0 : index
    %3 = vector.load %arg3[%c0, %c0_1] : memref<8x4xf32, #tpu.memory_space<vmem>>, vector<8x4xf32>
    %cst = arith.constant 0.000000e+00 : f32
    %4 = vector.broadcast %cst : f32 to vector<8x128xf32>
    %cst_2 = arith.constant 0.000000e+00 : f32
    %5 = vector.broadcast %cst_2 : f32 to vector<8x128xf32>
    %c0_i32_3 = arith.constant 0 : i32
    %c128_i32 = arith.constant 128 : i32
    %6 = arith.muli %c0_i32_3, %c128_i32 : i32
    %7 = tpu.assume_multiple %6, 128 : i32
    %c0_4 = arith.constant 0 : index
    %c0_5 = arith.constant 0 : index
    %8 = arith.index_cast %7 : i32 to index
    %9 = vector.load %arg2[%c0_4, %c0_5, %8] : memref<1x4x128xf32, #tpu.memory_space<vmem>>, vector<1x4x128xf32>
    %10 = vector.shape_cast %9 : vector<1x4x128xf32> to vector<4x128xf32>
    %cst_6 = arith.constant dense<0.000000e+00> : vector<8x128xf32>
    %11 = tpu.matmul %3, %10, %cst_6 {dimension_numbers = #tpu.dot_dimension_numbers<[1], [0], [0], [1], [0, 0, 1, 1], [], []>} : vector<8x4xf32>, vector<4x128xf32>, vector<8x128xf32> -> vector<8x128xf32>
    %12 = arith.addf %4, %11 : vector<8x128xf32>
    %13 = arith.mulf %11, %11 : vector<8x128xf32>
    %14 = arith.addf %5, %13 : vector<8x128xf32>
    %c1_i32 = arith.constant 1 : i32
    %cst_7 = arith.constant dense<0.000000e+00> : vector<8xf32>
    %15 = vector.multi_reduction <add>, %12, %cst_7 [1] : vector<8x128xf32> to vector<8xf32>
    %16 = vector.shape_cast %15 : vector<8xf32> to vector<8x1xf32>
    %cst_8 = arith.constant dense<0.000000e+00> : vector<8xf32>
    %17 = vector.multi_reduction <add>, %14, %cst_8 [1] : vector<8x128xf32> to vector<8xf32>
    %18 = vector.shape_cast %17 : vector<8xf32> to vector<8x1xf32>
    %c0_9 = arith.constant 0 : index
    %c0_10 = arith.constant 0 : index
    %c0_11 = arith.constant 0 : index
    %19 = vector.load %arg4[%c0_9, %c0_10, %c0_11] : memref<1x8x1xf32, #tpu.memory_space<vmem>>, vector<1x8x1xf32>
    %20 = vector.shape_cast %19 : vector<1x8x1xf32> to vector<8x1xf32>
    %21 = arith.addf %20, %16 : vector<8x1xf32>
    %c0_12 = arith.constant 0 : index
    %c0_13 = arith.constant 0 : index
    %c0_14 = arith.constant 0 : index
    %22 = vector.load %arg4[%c0_12, %c0_13, %c0_14] : memref<1x8x1xf32, #tpu.memory_space<vmem>>, vector<1x8x1xf32>
    %23 = vector.shape_cast %22 : vector<1x8x1xf32> to vector<8x1xf32>
    %24 = vector.shape_cast %21 : vector<8x1xf32> to vector<1x8x1xf32>
    tpu.vector_store %arg4[%c0_12, %c0_13, %c0_14], %24 {strides = array<i32>} : memref<1x8x1xf32, #tpu.memory_space<vmem>>, vector<1x8x1xf32>,
    %c0_15 = arith.constant 0 : index
    %c0_16 = arith.constant 0 : index
    %c0_17 = arith.constant 0 : index
    %25 = vector.load %arg5[%c0_15, %c0_16, %c0_17] : memref<1x8x1xf32, #tpu.memory_space<vmem>>, vector<1x8x1xf32>
    %26 = vector.shape_cast %25 : vector<1x8x1xf32> to vector<8x1xf32>
    %27 = arith.addf %26, %18 : vector<8x1xf32>
    %c0_18 = arith.constant 0 : index
    %c0_19 = arith.constant 0 : index
    %c0_20 = arith.constant 0 : index
    %28 = vector.load %arg5[%c0_18, %c0_19, %c0_20] : memref<1x8x1xf32, #tpu.memory_space<vmem>>, vector<1x8x1xf32>
    %29 = vector.shape_cast %28 : vector<1x8x1xf32> to vector<8x1xf32>
    %30 = vector.shape_cast %27 : vector<8x1xf32> to vector<1x8x1xf32>
    tpu.vector_store %arg5[%c0_18, %c0_19, %c0_20], %30 {strides = array<i32>} : memref<1x8x1xf32, #tpu.memory_space<vmem>>, vector<1x8x1xf32>,
    return
  }
  func.func @transform_0(%arg0: i32, %arg1: i32) -> (i32, i32, i32) {
    %c0_i32 = arith.constant 0 : i32
    %c0_i32_0 = arith.constant 0 : i32
    return %arg0, %c0_i32, %arg1 : i32, i32, i32
  }
  func.func @transform_1(%arg0: i32, %arg1: i32) -> (i32, i32) {
    %c0_i32 = arith.constant 0 : i32
    %c0_i32_0 = arith.constant 0 : i32
    %c0_i32_1 = arith.constant 0 : i32
    return %c0_i32, %c0_i32_0 : i32, i32
  }
  func.func @transform_2(%arg0: i32, %arg1: i32) -> (i32, i32, i32) {
    %c0_i32 = arith.constant 0 : i32
    %c0_i32_0 = arith.constant 0 : i32
    %c0_i32_1 = arith.constant 0 : i32
    return %arg0, %c0_i32, %c0_i32_0 : i32, i32, i32
  }
  func.func @transform_3(%arg0: i32, %arg1: i32) -> (i32, i32, i32) {
    %c0_i32 = arith.constant 0 : i32
    %c0_i32_0 = arith.constant 0 : i32
    %c0_i32_1 = arith.constant 0 : i32
    return %arg0, %c0_i32, %c0_i32_0 : i32, i32, i32
  }
}

</mosaic_0001>

<llo_original>
// kernel: tpu_custom_call.1
$region0: #{tpu_custom_call.1}
  #allocation0 [shape = 'u32[]', space=smem, size = 0x4, offset = 0x4, fixed_abs, tag = 'smem constant byte address 0x4 - core index']
  #allocation1 [shape = 'u32[72,128]{1,0:T(1,128)}', space=vmem, size = 0x9000, scoped, tag = 'internal scratch']
  %s0 = inlined_call_operand.vmem [shape: f32[2,4,128], index: 0, kind: input, shape index: {}]
  %s1 = inlined_call_operand.vmem [shape: f32[8,4], index: 1, kind: input, shape index: {}]
  %s2 = inlined_call_operand.vmem [shape: f32[2,8,1], index: 2, kind: output, shape index: {0}]
  %s3 = inlined_call_operand.vmem [shape: f32[2,8,1], index: 3, kind: output, shape index: {1}]
  %4 = xla_tuple %s2, %s3
  %s5 = sld [smem:[#allocation0]]
  $region53: #{tpu_custom_call.1} parent=0
    _
  %s7 = ssub.s32 1, %s5
  %s8 = scalar_select 0, %s7, %s5
  loop: start=0, step=1, limit=4
  $region2: #{tpu_custom_call.1} parent=0 // loop_pre_header
    _
  $region3: #{tpu_custom_call.1} parent=0 // loop_header
    %s10 = sphi 0, %s14
    %p11 = scmp.ge.s32.totalorder %s10, 4
    %s17 = sphi 0, %s29
    %s18 = sphi 0, %s25
    %s19 = sphi 0, %s17
    %s20 = sphi 0, %s18
    %s21 = sphi 0, %s19
    %s22 = sphi 0, %s20
    %s34 = sphi 0, %s36
    %s37 = sphi 0, %s34
    %s38 = sphi 0, %s37
    %s54 = sphi 0, %s38
    %s58 = sphi 0, %s58
    %s60 = sphi 0, %s58
    %s61 = sphi 0, %s60
    %s75 = sphi 0, %s61
    %s81 = sphi 0, %s83
    %s84 = sphi 0, %s81
    %s85 = sphi 0, %s84
    %s101 = sphi 0, %s85
    %s107 = sphi 0, %s109
    %s110 = sphi 0, %s107
    %s111 = sphi 0, %s110
    %s127 = sphi 0, %s111
  $region4: #{tpu_custom_call.1} parent=0 // loop_header_branch
    %13 = sbr.rel (%p11) target = $region8
  $region5: #{tpu_custom_call.1} parent=0 // loop_body
    %s15 = ssub.s32 %s10, 1
    %s16 = ssub.s32 %s10, 2
    %s23 = sadd.s32 1, %s18
    %p24 = scmp.ge.s32.totalorder %s23, 1
    %s25 = scalar_select %p24, 0, %s23
    %s26 = sadd.s32 1, %s17
    %s27 = scalar_select %p24, %s26, %s17
    %p28 = scmp.ge.s32.totalorder %s27, 2
    %s29 = scalar_select %p28, 0, %s27
    %s30 = ssub.s32 %s17, %s29
    %s31 = ssub.s32 %s18, %s25
    %s32 = sor.u32 %s30, %s31
    %p33 = scmp.eq.s32.totalorder %s32, 0
    %s35 = sadd.s32 %s34, 1
    %s36 = scalar_select %p33, %s34, %s35
    %p39 = pneg %p33
    %p40 = scmp.eq.s32.totalorder %s10, 1
    %p41 = por %p39, %p40
    %p42 = scmp.ne.s32.totalorder %s34, %s37
    %p43 = scmp.eq.s32.totalorder %s10, 0
    %p44 = por %p42, %p43
    %p45 = scmp.ne.s32.totalorder %s34, %s37
    %p46 = scmp.eq.s32.totalorder %s15, 1
    %p47 = por %p45, %p46
    %p48 = scmp.ne.s32.totalorder %s37, %s38
    %p49 = scmp.eq.s32.totalorder %s15, 0
    %p50 = por %p48, %p49
    %p51 = scmp.ne.s32.totalorder %s37, %s38
    %p52 = scmp.eq.s32.totalorder %s16, 1
    %p53 = por %p51, %p52
    %p55 = scmp.ne.s32.totalorder %s38, %s54
    %p56 = scmp.eq.s32.totalorder %s16, 0
    %p57 = por %p55, %p56
    %s59 = sadd.s32 %s58, 1
    %p62 = scmp.eq.s32.totalorder %s10, 1
    %p63 = scmp.ne.s32.totalorder %s58, %s60
    %p64 = scmp.eq.s32.totalorder %s10, 0
    %p65 = por %p63, %p64
    %p66 = scmp.ne.s32.totalorder %s58, %s60
    %p67 = scmp.eq.s32.totalorder %s15, 1
    %p68 = por %p66, %p67
    %p69 = scmp.ne.s32.totalorder %s60, %s61
    %p70 = scmp.eq.s32.totalorder %s15, 0
    %p71 = por %p69, %p70
    %p72 = scmp.ne.s32.totalorder %s60, %s61
    %p73 = scmp.eq.s32.totalorder %s16, 1
    %p74 = por %p72, %p73
    %p76 = scmp.ne.s32.totalorder %s61, %s75
    %p77 = scmp.eq.s32.totalorder %s16, 0
    %p78 = por %p76, %p77
    %s79 = ssub.s32 %s17, %s29
    %p80 = scmp.eq.s32.totalorder %s79, 0
    %s82 = sadd.s32 %s81, 1
    %s83 = scalar_select %p80, %s81, %s82
    %p86 = pneg %p80
    %p87 = scmp.eq.s32.totalorder %s10, 1
    %p88 = por %p86, %p87
    %p89 = scmp.ne.s32.totalorder %s81, %s84
    %p90 = scmp.eq.s32.totalorder %s10, 0
    %p91 = por %p89, %p90
    %p92 = scmp.ne.s32.totalorder %s81, %s84
    %p93 = scmp.eq.s32.totalorder %s15, 1
    %p94 = por %p92, %p93
    %p95 = scmp.ne.s32.totalorder %s84, %s85
    %p96 = scmp.eq.s32.totalorder %s15, 0
    %p97 = por %p95, %p96
    %p98 = scmp.ne.s32.totalorder %s84, %s85
    %p99 = scmp.eq.s32.totalorder %s16, 1
    %p100 = por %p98, %p99
    %p102 = scmp.ne.s32.totalorder %s85, %s101
    %p103 = scmp.eq.s32.totalorder %s16, 0
    %p104 = por %p102, %p103
    %s105 = ssub.s32 %s17, %s29
    %p106 = scmp.eq.s32.totalorder %s105, 0
    %s108 = sadd.s32 %s107, 1
    %s109 = scalar_select %p106, %s107, %s108
    %p112 = pneg %p106
    %p113 = scmp.eq.s32.totalorder %s10, 1
    %p114 = por %p112, %p113
    %p115 = scmp.ne.s32.totalorder %s107, %s110
    %p116 = scmp.eq.s32.totalorder %s10, 0
    %p117 = por %p115, %p116
    %p118 = scmp.ne.s32.totalorder %s107, %s110
    %p119 = scmp.eq.s32.totalorder %s15, 1
    %p120 = por %p118, %p119
    %p121 = scmp.ne.s32.totalorder %s110, %s111
    %p122 = scmp.eq.s32.totalorder %s15, 0
    %p123 = por %p121, %p122
    %p124 = scmp.ne.s32.totalorder %s110, %s111
    %p125 = scmp.eq.s32.totalorder %s16, 1
    %p126 = por %p124, %p125
    %p128 = scmp.ne.s32.totalorder %s111, %s127
    %p129 = scmp.eq.s32.totalorder %s16, 0
    %p130 = por %p128, %p129
    %p131 = scmp.le.s32.totalorder 1, %s10
    %p132 = scmp.lt.s32.totalorder %s10, 3
    %p133 = pnand %p131, %p132
    %p134 = pneg %p133
    // Predicated region
    $region9: #{tpu_custom_call.1} parent=5 // pred_check
      _
    $region10: #{tpu_custom_call.1} parent=5 // pred_check_branch
      %136 = sbr.rel (%p133) target = $region12
    $region11: #{tpu_custom_call.1} parent=5 // pred_region
      %s137 = ssub.s32 %s10, 1
      // Predicated region
      $region13: #{tpu_custom_call.1} parent=11 // pred_check
        %p138 = pneg %p71
      $region14: #{tpu_custom_call.1} parent=11 // pred_check_branch
        %140 = sbr.rel (%p138) target = $region16
      $region15: #{tpu_custom_call.1} parent=11 // pred_region
        _
      $region16: #{tpu_custom_call.1} parent=11 // pred_fallthru
        _
    $region12: #{tpu_custom_call.1} parent=5 // pred_fallthru
      _
    %p141 = scmp.lt.s32.totalorder %s10, 2
    // Predicated region
    $region17: #{tpu_custom_call.1} parent=5 // pred_check
      %p142 = pneg %p141
    $region18: #{tpu_custom_call.1} parent=5 // pred_check_branch
      %144 = sbr.rel (%p142) target = $region20
    $region19: #{tpu_custom_call.1} parent=5 // pred_region
      // Predicated region
      $region21: #{tpu_custom_call.1} parent=19 // pred_check
        %p145 = pneg %p44
      $region22: #{tpu_custom_call.1} parent=19 // pred_check_branch
        %147 = sbr.rel (%p145) target = $region24
      $region23: #{tpu_custom_call.1} parent=19 // pred_region
        %p148 = scmp.lt.s32.totalorder %s17, 1
        %s149 = scalar_select %p148, %s17, 1
        %p150 = scmp.lt.s32.totalorder %s18, 0
        %s151 = scalar_select %p150, %s18, 0
        %s152 = sadd.s32 %s151, %s149
        %s153 = smul.addr %s152, 4
        %s154 = scalar_lea.vmem %s0, %s153
      $region24: #{tpu_custom_call.1} parent=19 // pred_fallthru
        _
    $region20: #{tpu_custom_call.1} parent=5 // pred_fallthru
      _
    %p155 = scmp.le.s32.totalorder 1, %s10
    %p156 = scmp.lt.s32.totalorder %s10, 3
    %p157 = pnand %p155, %p156
    %p158 = pneg %p157
    // Predicated region
    $region25: #{tpu_custom_call.1} parent=5 // pred_check
      _
    $region26: #{tpu_custom_call.1} parent=5 // pred_check_branch
      %160 = sbr.rel (%p157) target = $region28
    $region27: #{tpu_custom_call.1} parent=5 // pred_region
      %s161 = ssub.s32 %s10, 1
      %p162 = scmp.lt.s32.totalorder %s19, 1
      %s163 = scalar_select %p162, %s19, 1
      %p164 = scmp.lt.s32.totalorder %s20, 0
      %s165 = scalar_select %p164, %s20, 0
      %s166 = sadd.s32 %s165, %s163
      %s167 = smul.addr %s166, 4
      %s168 = scalar_lea.vmem %s0, %s167
      %p169 = pneg %p50
      %p170 = pneg %p47
      %p171 = pneg %p71
      %p172 = pneg %p68
      %p173 = pneg %p97
      %p174 = pneg %p94
      %p175 = scmp.lt.s32.totalorder %s19, 1
      %s176 = scalar_select %p175, %s19, 1
      %s177 = smul.addr %s176, 8
      %s178 = scalar_lea.vmem %s2, %s177
      %p179 = pneg %p123
      %p180 = pneg %p120
      %p181 = scmp.lt.s32.totalorder %s19, 1
      %s182 = scalar_select %p181, %s19, 1
      %s183 = smul.addr %s182, 8
      %s184 = scalar_lea.vmem %s3, %s183
      %p185 = scmp.lt.s32.totalorder %s19, 1
      %s186 = scalar_select %p185, %s19, 1
      %p187 = scmp.lt.s32.totalorder %s20, 0
      %s188 = scalar_select %p187, %s20, 0
      %s189 = sadd.s32 %s188, %s186
      %s190 = smul.addr %s189, 4
      %s191 = scalar_lea.vmem %s0, %s190
      %p192 = scmp.lt.s32.totalorder %s19, 1
      %s193 = scalar_select %p192, %s19, 1
      %s194 = smul.addr %s193, 8
      %s195 = scalar_lea.vmem %s2, %s194
      %p196 = scmp.lt.s32.totalorder %s19, 1
      %s197 = scalar_select %p196, %s19, 1
      %s198 = smul.addr %s197, 8
      %s199 = scalar_lea.vmem %s3, %s198
      %p200 = scmp.eq.s32.totalorder %s20, 0
      // Predicated region
      $region29: #{tpu_custom_call.1} parent=27 // pred_check
        %p201 = pneg %p200
      $region30: #{tpu_custom_call.1} parent=27 // pred_check_branch
        %203 = sbr.rel (%p201) target = $region32
      $region31: #{tpu_custom_call.1} parent=27 // pred_region
        %vm204 = vcmask 7168
        %205 = vst.msk [vmem:[%s195] sm:$0xff] %vm204, 0.0
        %206 = vst.msk [vmem:[%s199] sm:$0xff] %vm204, 0.0
      $region32: #{tpu_custom_call.1} parent=27 // pred_fallthru
        _
      %v207 = vld [vmem:[%s1] sm:$0xff]
      %v208 = vld [vmem:[%s191] sm:$0xf]
      %vm209 = vcmask 31744
      %v211 = vsel %vm209, %v207, 0
      %vm213 = vcmask 1043456
      %v215 = vsel %vm213, %v208, 0
      %217 = vmatpush.msra.mxu0 0.0
      %218 = vmatpush.msra.mxu0 0.0
      %219 = vmatpush.msra.mxu0 0.0
      %220 = vmatpush.msra.mxu0 0.0
      %221 = vmatpush.msra.mxu0 0.0
      %222 = vmatpush.msra.mxu0 0.0
      %223 = vmatpush.msra.mxu0 0.0
      %224 = vmatpush.msra.mxu0 0.0
      %225 = vmatpush.msra.mxu0 0.0
      %226 = vmatpush.msra.mxu0 0.0
      %227 = vmatpush.msra.mxu0 0.0
      %228 = vmatpush.msra.mxu0 0.0
      %229 = vmatpush.msra.mxu0 0.0
      %230 = vmatpush.msra.mxu0 0.0
      %231 = vmatpush.msra.mxu0 0.0
      %232 = vmatpush.msra.mxu0 %v215
      %233 = vmatmul.f32.gmra.mxu0 %v211
      %v234 = vpop.f32.mrf.mxu0
      %v235 = vadd.f32 0.0, %v234
      %236 = vdwg.mxu0
      %v237 = vadd.f32 %v235, 0.0
      %v238 = vmul.f32 %v235, %v235
      %v239 = vadd.f32 %v238, 0.0
      %240 = vadd.xlane.f32.xlu0 %v237
      %v241 = vpop.xlane.xlu0 %240
      %242 = vadd.xlane.f32.xlu0 %v239
      %v243 = vpop.xlane.xlu0 %242
      %v244 = vld [vmem:[%s195] sm:$0xff]
      %v245 = vadd.f32 %v244, %v241
      %vm246 = vcmask 7168
      %247 = vst.msk [vmem:[%s195] sm:$0xff] %vm246, %v245
      %v248 = vld [vmem:[%s199] sm:$0xff]
      %v249 = vadd.f32 %v248, %v243
      %250 = vst.msk [vmem:[%s199] sm:$0xff] %vm246, %v249
      %p251 = scmp.lt.s32.totalorder %s19, 1
      %s252 = scalar_select %p251, %s19, 1
      %s253 = smul.addr %s252, 8
      %s254 = scalar_lea.vmem %s2, %s253
      %p255 = scmp.lt.s32.totalorder %s19, 1
      %s256 = scalar_select %p255, %s19, 1
      %s257 = smul.addr %s256, 8
      %s258 = scalar_lea.vmem %s3, %s257
      // Predicated region
      $region33: #{tpu_custom_call.1} parent=27 // pred_check
        %p259 = pneg %p94
      $region34: #{tpu_custom_call.1} parent=27 // pred_check_branch
        %261 = sbr.rel (%p259) target = $region36
      $region35: #{tpu_custom_call.1} parent=27 // pred_region
        _
      $region36: #{tpu_custom_call.1} parent=27 // pred_fallthru
        _
      // Predicated region
      $region37: #{tpu_custom_call.1} parent=27 // pred_check
        %p262 = pneg %p120
      $region38: #{tpu_custom_call.1} parent=27 // pred_check_branch
        %264 = sbr.rel (%p262) target = $region40
      $region39: #{tpu_custom_call.1} parent=27 // pred_region
        _
      $region40: #{tpu_custom_call.1} parent=27 // pred_fallthru
        _
    $region28: #{tpu_custom_call.1} parent=5 // pred_fallthru
      _
    %p265 = scmp.le.s32.totalorder 2, %s10
    // Predicated region
    $region41: #{tpu_custom_call.1} parent=5 // pred_check
      %p266 = pneg %p265
    $region42: #{tpu_custom_call.1} parent=5 // pred_check_branch
      %268 = sbr.rel (%p266) target = $region44
    $region43: #{tpu_custom_call.1} parent=5 // pred_region
      %s269 = ssub.s32 %s10, 2
      // Predicated region
      $region45: #{tpu_custom_call.1} parent=43 // pred_check
        %p270 = pneg %p100
      $region46: #{tpu_custom_call.1} parent=43 // pred_check_branch
        %272 = sbr.rel (%p270) target = $region48
      $region47: #{tpu_custom_call.1} parent=43 // pred_region
        %p273 = scmp.lt.s32.totalorder %s21, 1
        %s274 = scalar_select %p273, %s21, 1
        %s275 = smul.addr %s274, 8
        %s276 = scalar_lea.vmem %s2, %s275
      $region48: #{tpu_custom_call.1} parent=43 // pred_fallthru
        _
      // Predicated region
      $region49: #{tpu_custom_call.1} parent=43 // pred_check
        %p277 = pneg %p126
      $region50: #{tpu_custom_call.1} parent=43 // pred_check_branch
        %279 = sbr.rel (%p277) target = $region52
      $region51: #{tpu_custom_call.1} parent=43 // pred_region
        %p280 = scmp.lt.s32.totalorder %s21, 1
        %s281 = scalar_select %p280, %s21, 1
        %s282 = smul.addr %s281, 8
        %s283 = scalar_lea.vmem %s3, %s282
      $region52: #{tpu_custom_call.1} parent=43 // pred_fallthru
        _
    $region44: #{tpu_custom_call.1} parent=5 // pred_fallthru
      _
  $region6: #{tpu_custom_call.1} parent=0 // loop_footer
    %s14 = sadd.s32 1, %s10
  $region7: #{tpu_custom_call.1} parent=0 // loop_footer_branch
    %9 = sbr.rel target = $region3
  $region8: #{tpu_custom_call.1} parent=0 // loop_exit
    _

</llo_original>
